<compile_context>
chip_gen: v7x
topology: tpu7x:2x2x1
jax: 0.10.0
libtpu: 0.0.40
codegen_flags: <defaults>
</compile_context>

<pallas_src>
import functools
import math

import jax
import jax.numpy as jnp
from jax.experimental import pallas as pl
from jax.experimental.pallas import tpu as pltpu


def _round_up(v: int, m: int) -> int:
    return (v + m - 1) // m * m


def _pick_tile(total: int, target: int, multiple: int = 128) -> int:
    """Largest divisor of `total` that is a multiple of `multiple` and <= target."""
    best = multiple
    d = multiple
    limit = min(total, target)
    while d <= limit:
        if total % d == 0:
            best = d
        d += multiple
    return best


# ---------------------------------------------------------------------------
# Kernels
# ---------------------------------------------------------------------------
def _resident_kernel(*refs, has_bias):
    # Weight-resident fast path: full K in one block, no accumulator scratch.
    if has_bias:
        x_ref, w_ref, b_ref, o_ref = refs
    else:
        x_ref, w_ref, o_ref = refs
        b_ref = None
    acc = jnp.dot(x_ref[...], w_ref[...], preferred_element_type=jnp.float32)
    if has_bias:
        acc = acc + b_ref[...].astype(jnp.float32)
    o_ref[...] = acc.astype(o_ref.dtype)


def _kloop_kernel(*refs, has_bias):
    # Generic path: 3-D grid, K innermost, f32 accumulator in VMEM scratch.
    if has_bias:
        x_ref, w_ref, b_ref, o_ref, acc_ref = refs
    else:
        x_ref, w_ref, o_ref, acc_ref = refs
        b_ref = None

    k = pl.program_id(2)
    part = jnp.dot(x_ref[...], w_ref[...], preferred_element_type=jnp.float32)

    @pl.when(k == 0)
    def _first():
        # Direct store: saves the zero-init store + one acc read on the first
        # K step (relieves the 1-wide vst slot on v5e/v6e).
        acc_ref[...] = part

    @pl.when(k > 0)
    def _accum():
        acc_ref[...] += part

    @pl.when(k == pl.num_programs(2) - 1)
    def _finalize():
        out = acc_ref[...]
        if has_bias:
            out = out + b_ref[...].astype(jnp.float32)
        o_ref[...] = out.astype(o_ref.dtype)


# ---------------------------------------------------------------------------
# Parameter preparation (ONE-TIME, at load time)
# ---------------------------------------------------------------------------
def prepare_linear_params(weight, bias=None, *, compute_dtype=None):
    """One-time layout conversion of PyTorch-convention parameters.

    weight: (out_dim, in_dim)  -- PyTorch nn.Linear convention
    bias:   (out_dim,) or None
    compute_dtype: optional MXU input dtype (e.g. jnp.bfloat16); accumulation
                   stays f32 inside the kernel.
    """
    out_dim, in_dim = weight.shape
    k_pad = _round_up(in_dim, 128)
    n_pad = _round_up(out_dim, 128)

    w_t = jnp.asarray(weight).T  # (in_dim, out_dim)
    if (k_pad, n_pad) != (in_dim, out_dim):
        w_t = jnp.pad(w_t, ((0, k_pad - in_dim), (0, n_pad - out_dim)))
    if compute_dtype is not None:
        w_t = w_t.astype(compute_dtype)

    b_padded = None
    if bias is not None:
        b_padded = jnp.asarray(bias, jnp.float32).reshape(1, out_dim)
        if n_pad != out_dim:
            b_padded = jnp.pad(b_padded, ((0, 0), (0, n_pad - out_dim)))

    return {
        "weight": w_t,            # (k_pad, n_pad), possibly bf16
        "bias": b_padded,         # (1, n_pad) f32 or None
        "in_dim": in_dim,
        "out_dim": out_dim,
        "compute_dtype": compute_dtype,
    }


# ---------------------------------------------------------------------------
# Forward
# ---------------------------------------------------------------------------
def linear_norm_forward(x, params, *, tm_target=512, tk_target=1024,
                        fast_path_vmem_bytes=28 << 20, out_dtype=None):
    """y = x @ W^T + b, with W/b pre-laid-out by prepare_linear_params."""
    w = params["weight"]
    b = params["bias"]
    in_dim = params["in_dim"]
    out_dim = params["out_dim"]
    compute_dtype = params["compute_dtype"]
    k_pad, n_pad = w.shape

    assert x.shape[-1] == in_dim, "x last dim must equal in_dim"
    lead_shape = x.shape[:-1]
    m = int(math.prod(lead_shape)) if lead_shape else 1
    out_dtype = out_dtype if out_dtype is not None else x.dtype
    has_bias = b is not None

    x2d = x.reshape(m, in_dim)
    if compute_dtype is not None and x2d.dtype != compute_dtype:
        # Cast ONCE in the wrapper so DMA'd tiles are already in compute dtype.
        x2d = x2d.astype(compute_dtype)

    x_itemsize = jnp.dtype(x2d.dtype).itemsize
    w_itemsize = jnp.dtype(w.dtype).itemsize
    out_itemsize = jnp.dtype(out_dtype).itemsize
    sublane = 16 if x_itemsize == 2 else 8  # bf16 packs 16 rows / sublane tile

    # tm chosen to minimize M padding waste around tm_target.
    m_tiles_guess = max(1, pl.cdiv(m, tm_target))
    tm = _round_up(pl.cdiv(m, m_tiles_guess), sublane)
    m_pad = _round_up(m, tm)
    m_tiles = m_pad // tm

    # Pad x (per call -- x is new every call anyway).
    if (m_pad, k_pad) != (m, in_dim):
        x2d = jnp.pad(x2d, ((0, m_pad - m), (0, k_pad - in_dim)))

    weight_bytes = k_pad * n_pad * w_itemsize
    fast_bytes = (2 * weight_bytes
                  + 2 * tm * k_pad * x_itemsize
                  + 2 * tm * n_pad * out_itemsize
                  + (2 * n_pad * 4 if has_bias else 0))
    resident = (weight_bytes <= (12 << 20)) and (fast_bytes <= fast_path_vmem_bytes)

    if resident:
        # ------------------ weight-resident fast path ------------------
        tk = k_pad
        n_tiles = 1
        if m_tiles == 1 and n_pad % 256 == 0:
            n_tiles = 2  # keep both v7x TensorCores busy
        tn = n_pad // n_tiles
        grid = (m_tiles, n_tiles)
        kernel = functools.partial(_resident_kernel, has_bias=has_bias)
        in_specs = [
            pl.BlockSpec((tm, k_pad), lambda i, j: (i, 0)),
            pl.BlockSpec((k_pad, tn), lambda i, j: (0, j)),
        ]
        if has_bias:
            in_specs.append(pl.BlockSpec((1, tn), lambda i, j: (0, j)))
        out_specs = pl.BlockSpec((tm, tn), lambda i, j: (i, j))
        scratch_shapes = []
        dim_sem = ("parallel", "parallel")
    else:
        # ------------------------ generic path --------------------------
        tk = _pick_tile(k_pad, tk_target, 128)   # large tk -> fewer acc RMWs
        tn = _pick_tile(n_pad, 256, 128)         # 256-wide for v6e/v7x MXU
        if m_tiles * (n_pad // tn) == 1 and n_pad % 256 == 0:
            tn = n_pad // 2                      # >=2 parallel tiles for v7x
        grid = (m_tiles, n_pad // tn, k_pad // tk)
        kernel = functools.partial(_kloop_kernel, has_bias=has_bias)
        in_specs = [
            pl.BlockSpec((tm, tk), lambda i, j, k: (i, k)),
            pl.BlockSpec((tk, tn), lambda i, j, k: (k, j)),
        ]
        if has_bias:
            in_specs.append(pl.BlockSpec((1, tn), lambda i, j, k: (0, j)))
        out_specs = pl.BlockSpec((tm, tn), lambda i, j, k: (i, j))
        scratch_shapes = [pltpu.VMEM((tm, tn), jnp.float32)]
        dim_sem = ("parallel", "parallel", "arbitrary")

    # VMEM limit derived from actual (double-buffered) tile footprint.
    buf_bytes = (2 * tm * tk * x_itemsize
                 + 2 * tk * tn * w_itemsize
                 + 2 * tm * tn * out_itemsize
                 + (2 * tn * 4 if has_bias else 0))
    if not resident:
        buf_bytes += tm * tn * 4  # f32 accumulator scratch
    vmem_limit = int(min(max(buf_bytes + buf_bytes // 2 + (4 << 20), 16 << 20),
                         48 << 20))  # v7x-safe cap (64 MiB physical)

    # Advisory cost: weight is re-streamed once per M tile.
    cost = pl.CostEstimate(
        flops=2 * m * in_dim * out_dim,
        transcendentals=0,
        bytes_accessed=int(x_itemsize * m_pad * k_pad
                           + w_itemsize * k_pad * n_pad * m_tiles
                           + out_itemsize * m_pad * n_pad
                           + (4 * n_pad if has_bias else 0)),
    )

    operands = (x2d, w, b) if has_bias else (x2d, w)

    out2d = pl.pallas_call(
        kernel,
        out_shape=jax.ShapeDtypeStruct((m_pad, n_pad), out_dtype),
        grid_spec=pltpu.PrefetchScalarGridSpec(
            num_scalar_prefetch=0,
            grid=grid,
            in_specs=in_specs,
            out_specs=out_specs,
            scratch_shapes=scratch_shapes,
        ),
        compiler_params=pltpu.CompilerParams(
            dimension_semantics=dim_sem,
            vmem_limit_bytes=vmem_limit,
        ),
        cost_estimate=cost,
    )(*operands)

    out2d = out2d[:m, :out_dim]
    return out2d.reshape(*lead_shape, out_dim)


# ---------------------------------------------------------------------------
# Parameter init matching the PyTorch module semantics
# ---------------------------------------------------------------------------
def init_linear_norm_params(key, in_dim, out_dim, bias=True, w_init_gain="linear"):
    """xavier_uniform_ with gain=calculate_gain('linear')=1.0; nn.Linear bias init."""
    gain = 1.0
    k_w, k_b = jax.random.split(key)
    bound_w = gain * math.sqrt(6.0 / (in_dim + out_dim))
    weight = jax.random.uniform(
        k_w, (out_dim, in_dim), minval=-bound_w, maxval=bound_w, dtype=jnp.float32)
    if bias:
        bound_b = 1.0 / math.sqrt(in_dim)
        b = jax.random.uniform(
            k_b, (out_dim,), minval=-bound_b, maxval=bound_b, dtype=jnp.float32)
    else:
        b = None
    return weight, b


if __name__ == "__main__":
    key = jax.random.PRNGKey(0)
    k_x, k_p = jax.random.split(key)

    batch, seq, in_dim, out_dim = 2, 8, 32, 64
    x = jax.random.normal(k_x, (batch, seq, in_dim), dtype=jnp.float32)
    weight, bias = init_linear_norm_params(k_p, in_dim, out_dim)
    ref = x @ weight.T + bias

    # f32, weight-resident fast path (typical LinearNorm layer sizes).
    params = prepare_linear_params(weight, bias)
    out = jax.block_until_ready(linear_norm_forward(x, params))
    assert out.shape == (batch, seq, out_dim)
    assert jnp.allclose(out, ref, atol=1e-5, rtol=1e-5)

    # f32, forced generic 3-D (M,N,K) path.
    out_g = jax.block_until_ready(
        linear_norm_forward(x, params, fast_path_vmem_bytes=0))
    assert jnp.allclose(out_g, ref, atol=1e-5, rtol=1e-5)

    # No-bias path (bias operand skipped entirely).
    params_nb = prepare_linear_params(weight, None)
    out_nb = jax.block_until_ready(linear_norm_forward(x, params_nb))
    assert jnp.allclose(out_nb, x @ weight.T, atol=1e-5, rtol=1e-5)

    # bf16 MXU inputs (cast once at load/wrapper time), f32 accumulate.
    params_bf16 = prepare_linear_params(weight, bias, compute_dtype=jnp.bfloat16)
    out_bf = jax.block_until_ready(linear_norm_forward(x, params_bf16))
    assert jnp.allclose(out_bf, ref, atol=5e-2, rtol=5e-2)

    print("KERNEL_OK")
</pallas_src>

<mosaic_0001>
module attributes {stable_mosaic.version = 11 : i64} {
  func.func @_resident_kernel(%arg0: i32, %arg1: i32, %arg2: memref<16x128xf32, #tpu.memory_space<vmem>>, %arg3: memref<128x128xf32, #tpu.memory_space<vmem>>, %arg4: memref<1x128xf32, #tpu.memory_space<vmem>>, %arg5: memref<16x128xf32, #tpu.memory_space<vmem>>) attributes {dimension_semantics = [#tpu.dimension_semantics<parallel>, #tpu.dimension_semantics<parallel>], iteration_bounds = array<i64: 1, 1>, scalar_prefetch = 0 : i64, scratch_operands = 0 : i64, tpu.core_type = #tpu.core_type<tc>, window_params = [{transform_indices = @transform_0, window_bounds = array<i64: 16, 128>}, {transform_indices = @transform_1, window_bounds = array<i64: 128, 128>}, {transform_indices = @transform_2, window_bounds = array<i64: 1, 128>}, {transform_indices = @transform_3, window_bounds = array<i64: 16, 128>}]} {
    %c0 = arith.constant 0 : index
    %c0_0 = arith.constant 0 : index
    %0 = vector.load %arg2[%c0, %c0_0] : memref<16x128xf32, #tpu.memory_space<vmem>>, vector<16x128xf32>
    %c0_1 = arith.constant 0 : index
    %c0_2 = arith.constant 0 : index
    %1 = vector.load %arg3[%c0_1, %c0_2] : memref<128x128xf32, #tpu.memory_space<vmem>>, vector<128x128xf32>
    %cst = arith.constant dense<0.000000e+00> : vector<16x128xf32>
    %2 = tpu.matmul %0, %1, %cst {dimension_numbers = #tpu.dot_dimension_numbers<[1], [0], [0], [1], [0, 0, 1, 1], [], []>} : vector<16x128xf32>, vector<128x128xf32>, vector<16x128xf32> -> vector<16x128xf32>
    %c0_3 = arith.constant 0 : index
    %c0_4 = arith.constant 0 : index
    %3 = vector.load %arg4[%c0_3, %c0_4] : memref<1x128xf32, #tpu.memory_space<vmem>>, vector<1x128xf32>
    %4 = vector.broadcast %3 : vector<1x128xf32> to vector<16x128xf32>
    %5 = arith.addf %2, %4 : vector<16x128xf32>
    %c0_5 = arith.constant 0 : index
    %c0_6 = arith.constant 0 : index
    %6 = vector.load %arg5[%c0_5, %c0_6] : memref<16x128xf32, #tpu.memory_space<vmem>>, vector<16x128xf32>
    tpu.vector_store %arg5[%c0_5, %c0_6], %5 {strides = array<i32>} : memref<16x128xf32, #tpu.memory_space<vmem>>, vector<16x128xf32>,
    return
  }
  func.func @transform_0(%arg0: i32, %arg1: i32) -> (i32, i32) {
    %c0_i32 = arith.constant 0 : i32
    %c0_i32_0 = arith.constant 0 : i32
    return %arg0, %c0_i32 : i32, i32
  }
  func.func @transform_1(%arg0: i32, %arg1: i32) -> (i32, i32) {
    %c0_i32 = arith.constant 0 : i32
    %c0_i32_0 = arith.constant 0 : i32
    return %c0_i32, %arg1 : i32, i32
  }
  func.func @transform_2(%arg0: i32, %arg1: i32) -> (i32, i32) {
    %c0_i32 = arith.constant 0 : i32
    %c0_i32_0 = arith.constant 0 : i32
    return %c0_i32, %arg1 : i32, i32
  }
  func.func @transform_3(%arg0: i32, %arg1: i32) -> (i32, i32) {
    %c0_i32 = arith.constant 0 : i32
    return %arg0, %arg1 : i32, i32
  }
}

</mosaic_0001>

<llo_original>
// kernel: tpu_custom_call.1
$region0: #{tpu_custom_call.1}
  #allocation0 [shape = 'u32[]', space=smem, size = 0x4, offset = 0x4, fixed_abs, tag = 'smem constant byte address 0x4 - core index']
  #allocation1 [shape = 'u32[144,128]{1,0:T(1,128)}', space=vmem, size = 0x12000, scoped, tag = 'internal scratch']
  %s0 = inlined_call_operand.hbm [shape: f32[16,128], index: 0, kind: input, shape index: {}]
  %s1 = inlined_call_operand.hbm [shape: f32[128,128], index: 1, kind: input, shape index: {}]
  %s2 = inlined_call_operand.vmem [shape: f32[1,128], index: 2, kind: input, shape index: {}]
  %s3 = inlined_call_operand.hbm [shape: f32[16,128], index: 3, kind: output, shape index: {}]
  %s4 = sld [smem:[#allocation0]]
  $region30: #{tpu_custom_call.1} parent=0
    _
  %s6 = ssub.s32 1, %s4
  %s7 = scalar_select 0, %s6, %s4
  $region1: #{tpu_custom_call.1} parent=0
    #allocation2 [shape = 'u8[8192]{0}', space=vmem, size = 0x2000, scoped, tag = 'input window, operand 0, single buffered']
    #allocation3 [shape = 's32[1]{0}', space=sflag, size = 0x4, scoped, tag = 'scoped memory for tpu_custom_call.1']
    #allocation4 [shape = 's32[1]{0}', space=sflag, size = 0x4, scoped, tag = 'scoped memory for tpu_custom_call.1']
    #allocation5 [shape = 'u8[65536]{0}', space=vmem, size = 0x10000, scoped, tag = 'input window, operand 1, single buffered']
    #allocation6 [shape = 's32[1]{0}', space=sflag, size = 0x4, scoped, tag = 'scoped memory for tpu_custom_call.1']
    #allocation7 [shape = 'u8[8192]{0}', space=vmem, size = 0x2000, scoped, tag = 'output window, operand 0, single buffered']
    %8 = vsyncpa [#allocation3], 0
    %9 = vsyncpa [#allocation6], 0
    %10 = vsyncpa [#allocation4], 0
    // Predicated region
    $region2: #{tpu_custom_call.1} parent=1 // pred_check
      _
    $region3: #{tpu_custom_call.1} parent=1 // pred_check_branch
      %12 = sbr.rel (0) target = $region5
    $region4: #{tpu_custom_call.1} parent=1 // pred_region
      %s14 = ssub.s32 256, 256
      %15 = vsyncadd [#allocation3], %s14
      %s16 = sshll.u32 [#allocation2], 4
      %s17 = int_to_ptr.vmem [resolvable:$true] %s16
      %22 = dma.hbm_to_vmem [thread:$0]  %s0, 256, %s17, [#allocation3], 128, 128, 8
    $region5: #{tpu_custom_call.1} parent=1 // pred_fallthru
      _
    // Predicated region
    $region6: #{tpu_custom_call.1} parent=1 // pred_check
      _
    $region7: #{tpu_custom_call.1} parent=1 // pred_check_branch
      %24 = sbr.rel (0) target = $region9
    $region8: #{tpu_custom_call.1} parent=1 // pred_region
      %s26 = ssub.s32 2048, 2048
      %27 = vsyncadd [#allocation6], %s26
      %s28 = sshll.u32 [#allocation5], 4
      %s29 = int_to_ptr.vmem [resolvable:$true] %s28
      %34 = dma.hbm_to_vmem [thread:$0]  %s1, 2048, %s29, [#allocation6], 128, 128, 8
    $region9: #{tpu_custom_call.1} parent=1 // pred_fallthru
      _
    // Predicated region
    $region10: #{tpu_custom_call.1} parent=1 // pred_check
      _
    $region11: #{tpu_custom_call.1} parent=1 // pred_check_branch
      %36 = sbr.rel (0) target = $region13
    $region12: #{tpu_custom_call.1} parent=1 // pred_region
      _
    $region13: #{tpu_custom_call.1} parent=1 // pred_fallthru
      _
    // Predicated region
    $region14: #{tpu_custom_call.1} parent=1 // pred_check
      _
    $region15: #{tpu_custom_call.1} parent=1 // pred_check_branch
      %38 = sbr.rel (0) target = $region17
    $region16: #{tpu_custom_call.1} parent=1 // pred_region
      %39 = dma.done [#allocation3], 256
    $region17: #{tpu_custom_call.1} parent=1 // pred_fallthru
      _
    // Predicated region
    $region18: #{tpu_custom_call.1} parent=1 // pred_check
      _
    $region19: #{tpu_custom_call.1} parent=1 // pred_check_branch
      %41 = sbr.rel (0) target = $region21
    $region20: #{tpu_custom_call.1} parent=1 // pred_region
      %42 = dma.done [#allocation6], 2048
    $region21: #{tpu_custom_call.1} parent=1 // pred_fallthru
      _
    %v43 = vld [vmem:[#allocation2] sm:$0xff]
    %v44 = vld [vmem:[#allocation2 + $0x8] sm:$0xff]
    %v45 = vld [vmem:[#allocation5] sm:$0xff]
    %v46 = vld [vmem:[#allocation5 + $0x8] sm:$0xff]
    %v47 = vld [vmem:[#allocation5 + $0x10] sm:$0xff]
    %v48 = vld [vmem:[#allocation5 + $0x18] sm:$0xff]
    %v49 = vld [vmem:[#allocation5 + $0x20] sm:$0xff]
    %v50 = vld [vmem:[#allocation5 + $0x28] sm:$0xff]
    %v51 = vld [vmem:[#allocation5 + $0x30] sm:$0xff]
    %v52 = vld [vmem:[#allocation5 + $0x38] sm:$0xff]
    %v53 = vld [vmem:[#allocation5 + $0x40] sm:$0xff]
    %v54 = vld [vmem:[#allocation5 + $0x48] sm:$0xff]
    %v55 = vld [vmem:[#allocation5 + $0x50] sm:$0xff]
    %v56 = vld [vmem:[#allocation5 + $0x58] sm:$0xff]
    %v57 = vld [vmem:[#allocation5 + $0x60] sm:$0xff]
    %v58 = vld [vmem:[#allocation5 + $0x68] sm:$0xff]
    %v59 = vld [vmem:[#allocation5 + $0x70] sm:$0xff]
    %v60 = vld [vmem:[#allocation5 + $0x78] sm:$0xff]
    %v61 = vld [vmem:[%s2] sm:$0x1]
    %v63 = vlaneseq
    %v64 = vshrl.u32 %v63, 7
    %v65 = vsub.s32 0, %v64
    %v66 = vrot.slane %v61, %v65
    %68 = vmatprep.subr.mxu0 0.0
    %69 = vmatpush1.msra.mxu0 %v45
    %70 = vmatprep.subr.mxu0 0.0
    %71 = vmatpush1.msra.mxu0 %v46
    %72 = vmatprep.subr.mxu0 0.0
    %73 = vmatpush1.msra.mxu0 %v47
    %74 = vmatprep.subr.mxu0 0.0
    %75 = vmatpush1.msra.mxu0 %v48
    %76 = vmatprep.subr.mxu0 0.0
    %77 = vmatpush1.msra.mxu0 %v49
    %78 = vmatprep.subr.mxu0 0.0
    %79 = vmatpush1.msra.mxu0 %v50
    %80 = vmatprep.subr.mxu0 0.0
    %81 = vmatpush1.msra.mxu0 %v51
    %82 = vmatprep.subr.mxu0 0.0
    %83 = vmatpush1.msra.mxu0 %v52
    %84 = vmatprep.subr.mxu0 0.0
    %85 = vmatpush1.msra.mxu0 %v53
    %86 = vmatprep.subr.mxu0 0.0
    %87 = vmatpush1.msra.mxu0 %v54
    %88 = vmatprep.subr.mxu0 0.0
    %89 = vmatpush1.msra.mxu0 %v55
    %90 = vmatprep.subr.mxu0 0.0
    %91 = vmatpush1.msra.mxu0 %v56
    %92 = vmatprep.subr.mxu0 0.0
    %93 = vmatpush1.msra.mxu0 %v57
    %94 = vmatprep.subr.mxu0 0.0
    %95 = vmatpush1.msra.mxu0 %v58
    %96 = vmatprep.subr.mxu0 0.0
    %97 = vmatpush1.msra.mxu0 %v59
    %98 = vmatprep.subr.mxu0 0.0
    %99 = vmatpush1.msra.mxu0 %v60
    %100 = vmatprep.subr.mxu0 0.0
    %101 = vmatpush1.msra.mxu0 0.0
    %102 = vmatprep.subr.mxu0 0.0
    %103 = vmatpush1.msra.mxu0 0.0
    %104 = vmatprep.subr.mxu0 0.0
    %105 = vmatpush1.msra.mxu0 0.0
    %106 = vmatprep.subr.mxu0 0.0
    %107 = vmatpush1.msra.mxu0 0.0
    %108 = vmatprep.subr.mxu0 0.0
    %109 = vmatpush1.msra.mxu0 0.0
    %110 = vmatprep.subr.mxu0 0.0
    %111 = vmatpush1.msra.mxu0 0.0
    %112 = vmatprep.subr.mxu0 0.0
    %113 = vmatpush1.msra.mxu0 0.0
    %114 = vmatprep.subr.mxu0 0.0
    %115 = vmatpush1.msra.mxu0 0.0
    %116 = vmatprep.subr.mxu0 0.0
    %117 = vmatpush1.msra.mxu0 0.0
    %118 = vmatprep.subr.mxu0 0.0
    %119 = vmatpush1.msra.mxu0 0.0
    %120 = vmatprep.subr.mxu0 0.0
    %121 = vmatpush1.msra.mxu0 0.0
    %122 = vmatprep.subr.mxu0 0.0
    %123 = vmatpush1.msra.mxu0 0.0
    %124 = vmatprep.subr.mxu0 0.0
    %125 = vmatpush1.msra.mxu0 0.0
    %126 = vmatprep.subr.mxu0 0.0
    %127 = vmatpush1.msra.mxu0 0.0
    %128 = vmatprep.subr.mxu0 0.0
    %129 = vmatpush1.msra.mxu0 0.0
    %130 = vmatprep.subr.mxu0 0.0
    %131 = vmatpush1.msra.mxu0 0.0
    %132 = vmatprep.mubr.f32.mxu0 0.0
    %133 = vmatmul.mubr.f32.gmra.mrb[0].mxu0 %v43
    %v134 = vpop.f32.mrb[0].mxu0
    %v135 = vadd.f32 %v66, %v134
    %v136 = vpop.f32.mrb[0].mxu0
    %137 = vmatprep.mubr.f32.mxu0 0.0
    %138 = vmatmul.mubr.f32.gmra.mrb[0].mxu0 %v44
    %v139 = vpop.f32.mrb[0].mxu0
    %v140 = vadd.f32 %v66, %v139
    %v141 = vpop.f32.mrb[0].mxu0
    %142 = vdwg.mxu0
    %143 = vst [vmem:[#allocation7] sm:$0xff] %v135
    %144 = vst [vmem:[#allocation7 + $0x8] sm:$0xff] %v140
    // Predicated region
    $region22: #{tpu_custom_call.1} parent=1 // pred_check
      _
    $region23: #{tpu_custom_call.1} parent=1 // pred_check_branch
      %146 = sbr.rel (0) target = $region25
    $region24: #{tpu_custom_call.1} parent=1 // pred_region
      %s148 = ssub.s32 256, 256
      %149 = vsyncadd [#allocation4], %s148
      %s150 = sshll.u32 [#allocation7], 4
      %s151 = int_to_ptr.vmem [resolvable:$true] %s150
      %156 = dma.vmem_to_hbm [thread:$0]  %s151, 256, %s3, [#allocation4], 128, 128, 8
    $region25: #{tpu_custom_call.1} parent=1 // pred_fallthru
      _
    // Predicated region
    $region26: #{tpu_custom_call.1} parent=1 // pred_check
      _
    $region27: #{tpu_custom_call.1} parent=1 // pred_check_branch
      %158 = sbr.rel (0) target = $region29
    $region28: #{tpu_custom_call.1} parent=1 // pred_region
      %159 = dma.done [#allocation4], 256
    $region29: #{tpu_custom_call.1} parent=1 // pred_fallthru
      _
    %160 = vsyncpa [#allocation3], 1
    %161 = vsyncpa [#allocation6], 1
    %162 = vsyncpa [#allocation4], 1

</llo_original>
